<compile_context>
chip_gen: v6e
topology: v6e:2x2x1
jax: 0.10.0
libtpu: 0.0.40
codegen_flags: <defaults>
</compile_context>

<pallas_src>
import functools

import jax
import jax.numpy as jnp
from jax.experimental import pallas as pl
from jax.experimental.pallas import tpu as pltpu


_MIN_LANE_DENSE_FEATURES = 128      # below this the lane axis is badly under-filled
_TARGET_BLOCK_BYTES = 2 << 20       # ~2 MiB per input block


def _layernorm_kernel(x_ref, a_ref, b_ref, o_ref, *, eps: float, n_feat: float):
    x = x_ref[...].astype(jnp.float32)                 # (tile_rows, F)
    # One pass over x: both row reductions back-to-back (halves XLU/VALU walks
    # and keeps vreg live ranges short compared to mean-pass + diff**2-pass).
    sum_x = jnp.sum(x, axis=-1, keepdims=True)          # (tile_rows, 1)
    sum_xx = jnp.sum(x * x, axis=-1, keepdims=True)
    mean = sum_x * (1.0 / n_feat)
    # torch.std(): unbiased estimator (N-1). Degenerate (inf/nan) for F == 1,
    # same as torch — the wrapper never sends F < 128 here anyway.
    var = (sum_xx - sum_x * mean) * (1.0 / (n_feat - 1.0))
    var = jnp.maximum(var, 0.0)                          # guard tiny negative rounding
    std = jnp.sqrt(var)
    # Per-row reciprocal: tile_rows EUP ops instead of tile_rows*F divides.
    # approx=False keeps full f32 accuracy (approx=True is ~bf16-level).
    inv = pl.reciprocal(std + eps, approx=False)         # (tile_rows, 1)
    a = a_ref[...].astype(jnp.float32)                   # (1, F)
    b = b_ref[...].astype(jnp.float32)                   # (1, F)
    y = (x - mean) * inv * a + b
    o_ref[...] = y.astype(o_ref.dtype)


def _xla_layer_norm(x, a_2, b_2, eps):
    """Plain-JAX reference with the exact module semantics (unbiased std, eps on std)."""
    n = x.shape[-1]
    mean = jnp.mean(x, axis=-1, keepdims=True)
    diff = x - mean
    var = jnp.sum(diff * diff, axis=-1, keepdims=True) / (n - 1)
    std = jnp.sqrt(var)
    return a_2 * diff / (std + eps) + b_2


def _pick_tile_rows(rows: int, features: int, itemsize: int) -> int:
    """Row-tile so one block is ~2 MiB, a multiple of the sublane packing."""
    min_tile = 16 if itemsize == 2 else 8
    row_bytes = max(features * itemsize, 1)
    t = (_TARGET_BLOCK_BYTES // row_bytes // min_tile) * min_tile
    t = max(min_tile, t)
    # Never exceed the (sublane-padded) row count.
    padded_rows = ((rows + min_tile - 1) // min_tile) * min_tile
    t = min(t, padded_rows)
    # Keep at least 2 grid steps when possible: enables pipelining and lets
    # both v7x TensorCores take work on the "parallel" row axis.
    if rows >= 2 * min_tile:
        half = ((pl.cdiv(rows, 2) + min_tile - 1) // min_tile) * min_tile
        t = min(t, half)
    return t


def layer_norm(x, a_2, b_2, eps=1e-6, tile_rows=None):
    """x: (..., features); a_2, b_2: (features,). Matches the PyTorch module."""
    orig_shape = x.shape
    features = orig_shape[-1]

    if features < _MIN_LANE_DENSE_FEATURES:
        # Lane axis would be <25% occupied and every store masked (vst.msk);
        # plain XLA is the better path for tiny feature dims.
        # TODO(synk): pack 128//F rows per 128-lane slab + segmented reductions
        # to keep tiny-F shapes in Pallas.
        return _xla_layer_norm(x, a_2, b_2, eps)

    rows = 1
    for d in orig_shape[:-1]:
        rows *= d
    x2 = x.reshape(rows, features)
    a2 = a_2.reshape(1, features)
    b2 = b_2.reshape(1, features)

    itemsize = x.dtype.itemsize
    if tile_rows is None:
        tile_rows = _pick_tile_rows(rows, features, itemsize)

    grid = (pl.cdiv(rows, tile_rows),)

    # VMEM budget: in + out blocks, double-buffered, plus params + slack.
    block_bytes = tile_rows * features * itemsize
    vmem_need = 4 * block_bytes + 8 * features * 4 + (1 << 20)
    compiler_kwargs = dict(dimension_semantics=("parallel",))
    if vmem_need > (16 << 20):  # only raise above the smallest (v5e) scoped default
        compiler_kwargs["vmem_limit_bytes"] = int(min(vmem_need, 48 << 20))

    cost = pl.CostEstimate(
        flops=8 * rows * features,
        transcendentals=2 * rows,
        bytes_accessed=2 * rows * features * itemsize
        + 2 * features * a_2.dtype.itemsize,
    )

    kernel = functools.partial(
        _layernorm_kernel, eps=float(eps), n_feat=float(features)
    )

    out = pl.pallas_call(
        kernel,
        out_shape=jax.ShapeDtypeStruct((rows, features), x.dtype),
        grid_spec=pltpu.PrefetchScalarGridSpec(
            num_scalar_prefetch=0,
            grid=grid,
            in_specs=[
                pl.BlockSpec((tile_rows, features), lambda i: (i, 0)),
                pl.BlockSpec((1, features), lambda i: (0, 0)),
                pl.BlockSpec((1, features), lambda i: (0, 0)),
            ],
            out_specs=pl.BlockSpec((tile_rows, features), lambda i: (i, 0)),
        ),
        compiler_params=pltpu.CompilerParams(**compiler_kwargs),
        cost_estimate=cost,
    )(x2, a2, b2)
    return out.reshape(orig_shape)


if __name__ == "__main__":
    key = jax.random.PRNGKey(0)
    eps = 1e-6

    # Module init: a_2 = ones(features), b_2 = zeros(features) (deterministic).
    # Primary (lane-dense) Pallas path: batch=2, seq=8, hidden=256 -> grid of 2.
    batch, seq, hidden = 2, 8, 256
    k1, k2 = jax.random.split(key)
    x = jax.random.normal(k1, (batch, seq, hidden), dtype=jnp.float32)
    a_2 = jnp.ones((hidden,), dtype=jnp.float32)
    b_2 = jnp.zeros((hidden,), dtype=jnp.float32)

    out = jax.block_until_ready(layer_norm(x, a_2, b_2, eps=eps))
    ref = _xla_layer_norm(x, a_2, b_2, eps)
    assert jnp.max(jnp.abs(out - ref)) < 1e-4, "mismatch vs reference (lane-dense)"

    # Ragged rows (rows not a multiple of tile_rows -> partial, masked block).
    x_r = jax.random.normal(k2, (3, 5, hidden), dtype=jnp.float32)
    out_r = jax.block_until_ready(layer_norm(x_r, a_2, b_2, eps=eps))
    ref_r = _xla_layer_norm(x_r, a_2, b_2, eps)
    assert jnp.max(jnp.abs(out_r - ref_r)) < 1e-4, "mismatch vs reference (ragged)"

    # Tiny feature dim (F < 128): wrapper falls back to plain XLA.
    hidden_s = 32
    x_s = jax.random.normal(key, (2, 8, hidden_s), dtype=jnp.float32)
    a_s = jnp.ones((hidden_s,), dtype=jnp.float32)
    b_s = jnp.zeros((hidden_s,), dtype=jnp.float32)
    out_s = jax.block_until_ready(layer_norm(x_s, a_s, b_s, eps=eps))
    ref_s = _xla_layer_norm(x_s, a_s, b_s, eps)
    assert jnp.max(jnp.abs(out_s - ref_s)) < 1e-5, "mismatch vs reference (small F)"

    print("KERNEL_OK")
</pallas_src>

<mosaic_0001>
module attributes {stable_mosaic.version = 11 : i64} {
  func.func @_layernorm_kernel(%arg0: i32, %arg1: memref<8x256xf32, #tpu.memory_space<vmem>>, %arg2: memref<1x256xf32, #tpu.memory_space<vmem>>, %arg3: memref<1x256xf32, #tpu.memory_space<vmem>>, %arg4: memref<8x256xf32, #tpu.memory_space<vmem>>) attributes {dimension_semantics = [#tpu.dimension_semantics<parallel>], iteration_bounds = array<i64: 2>, scalar_prefetch = 0 : i64, scratch_operands = 0 : i64, tpu.core_type = #tpu.core_type<tc>, window_params = [{transform_indices = @transform_0, window_bounds = array<i64: 8, 256>}, {pipeline_mode = #tpu.pipeline_mode<synchronous>, transform_indices = @transform_1, window_bounds = array<i64: 1, 256>}, {pipeline_mode = #tpu.pipeline_mode<synchronous>, transform_indices = @transform_2, window_bounds = array<i64: 1, 256>}, {transform_indices = @transform_3, window_bounds = array<i64: 8, 256>}]} {
    %c0 = arith.constant 0 : index
    %c0_0 = arith.constant 0 : index
    %0 = vector.load %arg1[%c0, %c0_0] : memref<8x256xf32, #tpu.memory_space<vmem>>, vector<8x256xf32>
    %cst = arith.constant dense<0.000000e+00> : vector<8xf32>
    %1 = vector.multi_reduction <add>, %0, %cst [1] : vector<8x256xf32> to vector<8xf32>
    %2 = vector.shape_cast %1 : vector<8xf32> to vector<8x1xf32>
    %3 = arith.mulf %0, %0 : vector<8x256xf32>
    %cst_1 = arith.constant dense<0.000000e+00> : vector<8xf32>
    %4 = vector.multi_reduction <add>, %3, %cst_1 [1] : vector<8x256xf32> to vector<8xf32>
    %5 = vector.shape_cast %4 : vector<8xf32> to vector<8x1xf32>
    %cst_2 = arith.constant 3.906250e-03 : f32
    %6 = vector.broadcast %cst_2 : f32 to vector<8x1xf32>
    %7 = arith.mulf %2, %6 : vector<8x1xf32>
    %8 = arith.mulf %2, %7 : vector<8x1xf32>
    %9 = arith.subf %5, %8 : vector<8x1xf32>
    %cst_3 = arith.constant 0.00392156886 : f32
    %10 = vector.broadcast %cst_3 : f32 to vector<8x1xf32>
    %11 = arith.mulf %9, %10 : vector<8x1xf32>
    %cst_4 = arith.constant 0.000000e+00 : f32
    %12 = vector.broadcast %cst_4 : f32 to vector<8x1xf32>
    %13 = arith.maximumf %11, %12 : vector<8x1xf32>
    %14 = math.sqrt %13 : vector<8x1xf32>
    %cst_5 = arith.constant 9.99999997E-7 : f32
    %15 = vector.broadcast %cst_5 : f32 to vector<8x1xf32>
    %16 = arith.addf %14, %15 : vector<8x1xf32>
    %17 = tpu.reciprocal %16 : vector<8x1xf32> -> vector<8x1xf32>
    %c0_6 = arith.constant 0 : index
    %c0_7 = arith.constant 0 : index
    %18 = vector.load %arg2[%c0_6, %c0_7] : memref<1x256xf32, #tpu.memory_space<vmem>>, vector<1x256xf32>
    %c0_8 = arith.constant 0 : index
    %c0_9 = arith.constant 0 : index
    %19 = vector.load %arg3[%c0_8, %c0_9] : memref<1x256xf32, #tpu.memory_space<vmem>>, vector<1x256xf32>
    %20 = vector.broadcast %7 : vector<8x1xf32> to vector<8x256xf32>
    %21 = arith.subf %0, %20 : vector<8x256xf32>
    %22 = vector.broadcast %17 : vector<8x1xf32> to vector<8x256xf32>
    %23 = arith.mulf %21, %22 : vector<8x256xf32>
    %24 = vector.broadcast %18 : vector<1x256xf32> to vector<8x256xf32>
    %25 = arith.mulf %23, %24 : vector<8x256xf32>
    %26 = vector.broadcast %19 : vector<1x256xf32> to vector<8x256xf32>
    %27 = arith.addf %25, %26 : vector<8x256xf32>
    %c0_10 = arith.constant 0 : index
    %c0_11 = arith.constant 0 : index
    %28 = vector.load %arg4[%c0_10, %c0_11] : memref<8x256xf32, #tpu.memory_space<vmem>>, vector<8x256xf32>
    tpu.vector_store %arg4[%c0_10, %c0_11], %27 {strides = array<i32>} : memref<8x256xf32, #tpu.memory_space<vmem>>, vector<8x256xf32>,
    return
  }
  func.func @transform_0(%arg0: i32) -> (i32, i32) {
    %c0_i32 = arith.constant 0 : i32
    %c0_i32_0 = arith.constant 0 : i32
    return %arg0, %c0_i32 : i32, i32
  }
  func.func @transform_1(%arg0: i32) -> (i32, i32) {
    %c0_i32 = arith.constant 0 : i32
    %c0_i32_0 = arith.constant 0 : i32
    %c0_i32_1 = arith.constant 0 : i32
    return %c0_i32, %c0_i32_0 : i32, i32
  }
  func.func @transform_2(%arg0: i32) -> (i32, i32) {
    %c0_i32 = arith.constant 0 : i32
    %c0_i32_0 = arith.constant 0 : i32
    %c0_i32_1 = arith.constant 0 : i32
    return %c0_i32, %c0_i32_0 : i32, i32
  }
  func.func @transform_3(%arg0: i32) -> (i32, i32) {
    %c0_i32 = arith.constant 0 : i32
    %c0_i32_0 = arith.constant 0 : i32
    return %arg0, %c0_i32 : i32, i32
  }
}

</mosaic_0001>

<llo_original>
// kernel: tpu_custom_call.1
$region0: #{tpu_custom_call.1}
  #allocation0 [shape = 'u32[]', space=smem, size = 0x4, offset = 0x4, fixed_abs, tag = 'smem constant byte address 0x4 - core index']
  #allocation1 [shape = 'u32[144,128]{1,0:T(1,128)}', space=vmem, size = 0x12000, scoped, tag = 'internal scratch']
  %s0 = inlined_call_operand.hbm [shape: f32[16,256], index: 0, kind: input, shape index: {}]
  %s1 = inlined_call_operand.hbm [shape: f32[1,256], index: 1, kind: input, shape index: {}]
  %s2 = inlined_call_operand.vmem [shape: f32[1,256], index: 2, kind: input, shape index: {}]
  %s3 = inlined_call_operand.hbm [shape: f32[16,256], index: 3, kind: output, shape index: {}]
  %s4 = sld [smem:[#allocation0]]
  $region53: #{tpu_custom_call.1} parent=0
    _
  %s6 = ssub.s32 1, %s4
  %s7 = scalar_select 0, %s6, %s4
  $region1: #{tpu_custom_call.1} parent=0
    #allocation2 [shape = 'u8[16384]{0}', space=vmem, size = 0x4000, scoped, tag = 'input window, operand 0']
    #allocation3 [shape = 's32[2]{0}', space=sflag, size = 0x8, scoped, tag = 'scoped memory for tpu_custom_call.1']
    #allocation4 [shape = 's32[2]{0}', space=sflag, size = 0x8, scoped, tag = 'scoped memory for tpu_custom_call.1']
    #allocation5 [shape = 'u8[1024]{0}', space=vmem, size = 0x400, scoped, tag = 'input window, operand 1, single buffered']
    #allocation6 [shape = 's32[1]{0}', space=sflag, size = 0x4, scoped, tag = 'scoped memory for tpu_custom_call.1']
    #allocation7 [shape = 'u8[16384]{0}', space=vmem, size = 0x4000, scoped, tag = 'output window, operand 0']
    %8 = vsyncpa [#allocation3], 0
    %s9 = scalar_lea.sflag [#allocation3], 1
    %10 = vsyncpa %s9, 0
    %11 = vsyncpa [#allocation6], 0
    %12 = vsyncpa [#allocation4], 0
    %s13 = scalar_lea.sflag [#allocation4], 1
    %14 = vsyncpa %s13, 0
    loop: start=0, step=1, limit=4
    $region2: #{tpu_custom_call.1} parent=1 // loop_pre_header
      _
    $region3: #{tpu_custom_call.1} parent=1 // loop_header
      %s16 = sphi 0, %s20
      %p17 = scmp.ge.s32.totalorder %s16, 4
      %s26 = sphi 0, %s28
      %s29 = sphi 0, %s26
      %s30 = sphi 0, %s29
      %s46 = sphi 0, %s30
      %s50 = sphi 0, %s50
      %s52 = sphi 0, %s50
      %s53 = sphi 0, %s52
      %s67 = sphi 0, %s53
      %s71 = sphi 0, %s71
      %s73 = sphi 0, %s71
      %s74 = sphi 0, %s73
      %s88 = sphi 0, %s74
      %s94 = sphi 0, %s96
      %s97 = sphi 0, %s94
      %s98 = sphi 0, %s97
      %s114 = sphi 0, %s98
    $region4: #{tpu_custom_call.1} parent=1 // loop_header_branch
      %19 = sbr.rel (%p17) target = $region8
    $region5: #{tpu_custom_call.1} parent=1 // loop_body
      %s21 = ssub.s32 %s16, 1
      %s22 = ssub.s32 %s16, 2
      %s23 = sadd.s32 %s16, 1
      %s24 = ssub.s32 %s16, %s23
      %p25 = scmp.eq.s32.totalorder %s24, 0
      %s27 = sadd.s32 %s26, 1
      %s28 = scalar_select %p25, %s26, %s27
      %p31 = pneg %p25
      %p32 = scmp.eq.s32.totalorder %s16, 1
      %p33 = por %p31, %p32
      %p34 = scmp.ne.s32.totalorder %s26, %s29
      %p35 = scmp.eq.s32.totalorder %s16, 0
      %p36 = por %p34, %p35
      %p37 = scmp.ne.s32.totalorder %s26, %s29
      %p38 = scmp.eq.s32.totalorder %s21, 1
      %p39 = por %p37, %p38
      %p40 = scmp.ne.s32.totalorder %s29, %s30
      %p41 = scmp.eq.s32.totalorder %s21, 0
      %p42 = por %p40, %p41
      %p43 = scmp.ne.s32.totalorder %s29, %s30
      %p44 = scmp.eq.s32.totalorder %s22, 1
      %p45 = por %p43, %p44
      %p47 = scmp.ne.s32.totalorder %s30, %s46
      %p48 = scmp.eq.s32.totalorder %s22, 0
      %p49 = por %p47, %p48
      %s51 = sadd.s32 %s50, 1
      %p54 = scmp.eq.s32.totalorder %s16, 1
      %p55 = scmp.ne.s32.totalorder %s50, %s52
      %p56 = scmp.eq.s32.totalorder %s16, 0
      %p57 = por %p55, %p56
      %p58 = scmp.ne.s32.totalorder %s50, %s52
      %p59 = scmp.eq.s32.totalorder %s21, 1
      %p60 = por %p58, %p59
      %p61 = scmp.ne.s32.totalorder %s52, %s53
      %p62 = scmp.eq.s32.totalorder %s21, 0
      %p63 = por %p61, %p62
      %p64 = scmp.ne.s32.totalorder %s52, %s53
      %p65 = scmp.eq.s32.totalorder %s22, 1
      %p66 = por %p64, %p65
      %p68 = scmp.ne.s32.totalorder %s53, %s67
      %p69 = scmp.eq.s32.totalorder %s22, 0
      %p70 = por %p68, %p69
      %s72 = sadd.s32 %s71, 1
      %p75 = scmp.eq.s32.totalorder %s16, 1
      %p76 = scmp.ne.s32.totalorder %s71, %s73
      %p77 = scmp.eq.s32.totalorder %s16, 0
      %p78 = por %p76, %p77
      %p79 = scmp.ne.s32.totalorder %s71, %s73
      %p80 = scmp.eq.s32.totalorder %s21, 1
      %p81 = por %p79, %p80
      %p82 = scmp.ne.s32.totalorder %s73, %s74
      %p83 = scmp.eq.s32.totalorder %s21, 0
      %p84 = por %p82, %p83
      %p85 = scmp.ne.s32.totalorder %s73, %s74
      %p86 = scmp.eq.s32.totalorder %s22, 1
      %p87 = por %p85, %p86
      %p89 = scmp.ne.s32.totalorder %s74, %s88
      %p90 = scmp.eq.s32.totalorder %s22, 0
      %p91 = por %p89, %p90
      %s92 = ssub.s32 %s16, %s23
      %p93 = scmp.eq.s32.totalorder %s92, 0
      %s95 = sadd.s32 %s94, 1
      %s96 = scalar_select %p93, %s94, %s95
      %p99 = pneg %p93
      %p100 = scmp.eq.s32.totalorder %s16, 1
      %p101 = por %p99, %p100
      %p102 = scmp.ne.s32.totalorder %s94, %s97
      %p103 = scmp.eq.s32.totalorder %s16, 0
      %p104 = por %p102, %p103
      %p105 = scmp.ne.s32.totalorder %s94, %s97
      %p106 = scmp.eq.s32.totalorder %s21, 1
      %p107 = por %p105, %p106
      %p108 = scmp.ne.s32.totalorder %s97, %s98
      %p109 = scmp.eq.s32.totalorder %s21, 0
      %p110 = por %p108, %p109
      %p111 = scmp.ne.s32.totalorder %s97, %s98
      %p112 = scmp.eq.s32.totalorder %s22, 1
      %p113 = por %p111, %p112
      %p115 = scmp.ne.s32.totalorder %s98, %s114
      %p116 = scmp.eq.s32.totalorder %s22, 0
      %p117 = por %p115, %p116
      %p118 = scmp.le.s32.totalorder 1, %s16
      %p119 = scmp.lt.s32.totalorder %s16, 3
      %p120 = pnand %p118, %p119
      %p121 = pneg %p120
      // Predicated region
      $region9: #{tpu_custom_call.1} parent=5 // pred_check
        _
      $region10: #{tpu_custom_call.1} parent=5 // pred_check_branch
        %123 = sbr.rel (%p120) target = $region12
      $region11: #{tpu_custom_call.1} parent=5 // pred_region
        %s124 = ssub.s32 %s16, 1
        // Predicated region
        $region13: #{tpu_custom_call.1} parent=11 // pred_check
          %p125 = pneg %p63
        $region14: #{tpu_custom_call.1} parent=11 // pred_check_branch
          %127 = sbr.rel (%p125) target = $region16
        $region15: #{tpu_custom_call.1} parent=11 // pred_region
          %s129 = ssub.s32 32, 32
          %130 = vsyncadd [#allocation6], %s129
          %s132 = sshll.u32 [#allocation5], 4
          %s133 = int_to_ptr.vmem [resolvable:$true] %s132
          %135 = dma.hbm_to_vmem [thread:$0]  %s1, 32, %s133, [#allocation6]
        $region16: #{tpu_custom_call.1} parent=11 // pred_fallthru
          _
        // Predicated region
        $region17: #{tpu_custom_call.1} parent=11 // pred_check
          %p136 = pneg %p84
        $region18: #{tpu_custom_call.1} parent=11 // pred_check_branch
          %138 = sbr.rel (%p136) target = $region20
        $region19: #{tpu_custom_call.1} parent=11 // pred_region
          _
        $region20: #{tpu_custom_call.1} parent=11 // pred_fallthru
          _
      $region12: #{tpu_custom_call.1} parent=5 // pred_fallthru
        _
      %p139 = scmp.lt.s32.totalorder %s16, 2
      // Predicated region
      $region21: #{tpu_custom_call.1} parent=5 // pred_check
        %p140 = pneg %p139
      $region22: #{tpu_custom_call.1} parent=5 // pred_check_branch
        %142 = sbr.rel (%p140) target = $region24
      $region23: #{tpu_custom_call.1} parent=5 // pred_region
        // Predicated region
        $region25: #{tpu_custom_call.1} parent=23 // pred_check
          %p143 = pneg %p36
        $region26: #{tpu_custom_call.1} parent=23 // pred_check_branch
          %145 = sbr.rel (%p143) target = $region28
        $region27: #{tpu_custom_call.1} parent=23 // pred_region
          %s146 = sand.u32 %s26, 1
          %s147 = scalar_lea.sflag [#allocation3], %s146
          %s148 = sand.u32 %s26, 1
          %s149 = smul.addr %s148, 16
          %s150 = scalar_lea.vmem [#allocation2], %s149
          %s152 = ssub.s32 256, 256
          %153 = vsyncadd %s147, %s152
          %s154 = smul.addr %s16, 2
          %s155 = smul.addr %s154, 128
          %s156 = scalar_lea.hbm %s0, %s155
          %s158 = sshll.u32 %s150, 4
          %s159 = int_to_ptr.vmem [resolvable:$true] %s158
          %161 = dma.hbm_to_vmem [thread:$0]  %s156, 256, %s159, %s147
        $region28: #{tpu_custom_call.1} parent=23 // pred_fallthru
          _
      $region24: #{tpu_custom_call.1} parent=5 // pred_fallthru
        _
      %p162 = scmp.le.s32.totalorder 1, %s16
      %p163 = scmp.lt.s32.totalorder %s16, 3
      %p164 = pnand %p162, %p163
      %p165 = pneg %p164
      // Predicated region
      $region29: #{tpu_custom_call.1} parent=5 // pred_check
        _
      $region30: #{tpu_custom_call.1} parent=5 // pred_check_branch
        %167 = sbr.rel (%p164) target = $region32
      $region31: #{tpu_custom_call.1} parent=5 // pred_region
        %s168 = ssub.s32 %s16, 1
        %s169 = sand.u32 %s29, 1
        %s170 = scalar_lea.sflag [#allocation3], %s169
        %s171 = sand.u32 %s29, 1
        %s172 = smul.addr %s171, 16
        %s173 = scalar_lea.vmem [#allocation2], %s172
        // Predicated region
        $region33: #{tpu_custom_call.1} parent=31 // pred_check
          %p174 = pneg %p42
        $region34: #{tpu_custom_call.1} parent=31 // pred_check_branch
          %176 = sbr.rel (%p174) target = $region36
        $region35: #{tpu_custom_call.1} parent=31 // pred_region
          %177 = dma.done %s170, 256
        $region36: #{tpu_custom_call.1} parent=31 // pred_fallthru
          _
        // Predicated region
        $region37: #{tpu_custom_call.1} parent=31 // pred_check
          %p178 = pneg %p63
        $region38: #{tpu_custom_call.1} parent=31 // pred_check_branch
          %180 = sbr.rel (%p178) target = $region40
        $region39: #{tpu_custom_call.1} parent=31 // pred_region
          %181 = dma.done [#allocation6], 32
        $region40: #{tpu_custom_call.1} parent=31 // pred_fallthru
          _
        %s182 = sand.u32 %s29, 1
        %s183 = scalar_lea.sflag [#allocation3], %s182
        %s184 = sand.u32 %s29, 1
        %s185 = smul.addr %s184, 16
        %s186 = scalar_lea.vmem [#allocation2], %s185
        %p187 = pneg %p42
        %p188 = pneg %p39
        %p189 = pneg %p63
        %p190 = pneg %p60
        %p191 = pneg %p84
        %p192 = pneg %p81
        %p193 = pneg %p110
        %p194 = pneg %p107
        %s195 = sand.u32 %s97, 1
        %s196 = scalar_lea.sflag [#allocation4], %s195
        %s197 = sand.u32 %s97, 1
        %s198 = smul.addr %s197, 16
        %s199 = scalar_lea.vmem [#allocation7], %s198
        %v200 = vld [vmem:[%s173] sm:$0xff]
        %v201 = vld [vmem:[%s173 + $0x8] sm:$0xff]
        %v202 = vadd.f32 %v200, %v201
        %203 = vadd.xlane.f32.xlu0 %v202
        %v204 = vpop.xlane.xlu0 %203
        %v205 = vmul.f32 %v200, %v200
        %v206 = vmul.f32 %v201, %v201
        %v207 = vadd.f32 %v205, %v206
        %208 = vadd.xlane.f32.xlu0 %v207
        %v209 = vpop.xlane.xlu0 %208
        %v210 = vmul.f32 %v204, 0.00390625
        %v211 = vmul.f32 %v204, %v210
        %v212 = vsub.f32 %v209, %v211
        %v213 = vmul.f32 %v212, 0.003921569
        %v214 = vmax.f32 %v213, 0.0
        %v215 = vrsqrt.pop %v214
        %v216 = vmul.f32 %v214, %v215
        %vm217 = vcmp.eq.f32.partialorder %v214, inf
        %v218 = vsel %vm217, %v214, %v216
        %vm219 = vcmp.eq.f32.partialorder %v214, 0.0
        %v220 = vand.u32 %v214, 2147483648
        %v221 = vsel %vm219, %v220, %v218
        %v222 = vadd.f32 %v221, 1e-06
        %v223 = vrcp.pop %v222
        %v224 = vld [vmem:[#allocation5] sm:$0x3]
        %v225 = vld [vmem:[%s2] sm:$0x3]
        %v226 = vsub.f32 %v200, %v210
        %v227 = vsub.f32 %v201, %v210
        %v228 = vmul.f32 %v226, %v223
        %v229 = vmul.f32 %v227, %v223
        %v231 = vlaneseq
        %v232 = vshrl.u32 %v231, 7
        %v233 = vsub.s32 0, %v232
        %v234 = vrot.slane %v224, %v233
        %v235 = vlaneseq
        %v236 = vshrl.u32 %v235, 7
        %v237 = vsub.s32 1, %v236
        %v238 = vrot.slane %v224, %v237
        %v241 = vmul.f32 %v228, %v234
        %v242 = vmul.f32 %v229, %v238
        %v244 = vlaneseq
        %v245 = vshrl.u32 %v244, 7
        %v246 = vsub.s32 0, %v245
        %v247 = vrot.slane %v225, %v246
        %v248 = vlaneseq
        %v249 = vshrl.u32 %v248, 7
        %v250 = vsub.s32 1, %v249
        %v251 = vrot.slane %v225, %v250
        %v254 = vadd.f32 %v241, %v247
        %v255 = vadd.f32 %v242, %v251
        %256 = vst [vmem:[%s199] sm:$0xff] %v254
        %257 = vst [vmem:[%s199 + $0x8] sm:$0xff] %v255
        %s258 = sand.u32 %s97, 1
        %s259 = scalar_lea.sflag [#allocation4], %s258
        %s260 = sand.u32 %s97, 1
        %s261 = smul.addr %s260, 16
        %s262 = scalar_lea.vmem [#allocation7], %s261
        // Predicated region
        $region41: #{tpu_custom_call.1} parent=31 // pred_check
          %p263 = pneg %p107
        $region42: #{tpu_custom_call.1} parent=31 // pred_check_branch
          %265 = sbr.rel (%p263) target = $region44
        $region43: #{tpu_custom_call.1} parent=31 // pred_region
          %s267 = ssub.s32 256, 256
          %268 = vsyncadd %s259, %s267
          %s269 = smul.addr %s21, 2
          %s270 = smul.addr %s269, 128
          %s271 = scalar_lea.hbm %s3, %s270
          %s273 = sshll.u32 %s262, 4
          %s274 = int_to_ptr.vmem [resolvable:$true] %s273
          %276 = dma.vmem_to_hbm [thread:$0]  %s274, 256, %s271, %s259
        $region44: #{tpu_custom_call.1} parent=31 // pred_fallthru
          _
      $region32: #{tpu_custom_call.1} parent=5 // pred_fallthru
        _
      %p277 = scmp.le.s32.totalorder 2, %s16
      // Predicated region
      $region45: #{tpu_custom_call.1} parent=5 // pred_check
        %p278 = pneg %p277
      $region46: #{tpu_custom_call.1} parent=5 // pred_check_branch
        %280 = sbr.rel (%p278) target = $region48
      $region47: #{tpu_custom_call.1} parent=5 // pred_region
        %s281 = ssub.s32 %s16, 2
        // Predicated region
        $region49: #{tpu_custom_call.1} parent=47 // pred_check
          %p282 = pneg %p113
        $region50: #{tpu_custom_call.1} parent=47 // pred_check_branch
          %284 = sbr.rel (%p282) target = $region52
        $region51: #{tpu_custom_call.1} parent=47 // pred_region
          %s285 = sand.u32 %s98, 1
          %s286 = scalar_lea.sflag [#allocation4], %s285
          %s287 = sand.u32 %s98, 1
          %s288 = smul.addr %s287, 16
          %s289 = scalar_lea.vmem [#allocation7], %s288
          %290 = dma.done %s286, 256
        $region52: #{tpu_custom_call.1} parent=47 // pred_fallthru
          _
      $region48: #{tpu_custom_call.1} parent=5 // pred_fallthru
        _
    $region6: #{tpu_custom_call.1} parent=1 // loop_footer
      %s20 = sadd.s32 1, %s16
    $region7: #{tpu_custom_call.1} parent=1 // loop_footer_branch
      %15 = sbr.rel target = $region3
    $region8: #{tpu_custom_call.1} parent=1 // loop_exit
      _
    %291 = vsyncpa [#allocation3], 1
    %s292 = scalar_lea.sflag [#allocation3], 1
    %293 = vsyncpa %s292, 1
    %294 = vsyncpa [#allocation6], 1
    %295 = vsyncpa [#allocation4], 1
    %s296 = scalar_lea.sflag [#allocation4], 1
    %297 = vsyncpa %s296, 1

</llo_original>
